<compile_context>
chip_gen: v7x
topology: tpu7x:2x2x1
jax: 0.10.0
libtpu: 0.0.40
codegen_flags: <defaults>
</compile_context>

<pallas_src>
import jax
import jax.numpy as jnp
from jax.experimental import pallas as pl
from jax.experimental.pallas import tpu as pltpu


def _round_up(x, m):
    return (x + m - 1) // m * m


def mlp_kernel(x_ref, w1_ref, b1_ref, w2_ref, b2_ref, w3_ref, b3_ref, o_ref):
    x = x_ref[...].astype(jnp.bfloat16)                                  # f32 -> bf16 in-kernel
    h1 = jnp.dot(x, w1_ref[...], preferred_element_type=jnp.float32)    # (TB, 256) f32
    h1 = jnp.maximum(h1 + b1_ref[...], 0.0)                              # ReLU(fc1)
    # dropout: identity (eval mode)
    h1 = h1.astype(jnp.bfloat16)
    h2 = jnp.dot(h1, w2_ref[...], preferred_element_type=jnp.float32)   # (TB, 128) f32
    h2 = jnp.maximum(h2 + b2_ref[...], 0.0)                              # ReLU(fc2)
    h2 = h2.astype(jnp.bfloat16)
    out = jnp.dot(h2, w3_ref[...], preferred_element_type=jnp.float32)  # (TB, 8) f32
    o_ref[...] = out + b3_ref[...]                                       # 32 B/row writeback


def _choose_tiling(B):
    """Batch tiling: TB multiple of 16 (bf16 sublane pack); >=2 even grid steps
    for B > 256 (v7x 2-TC sharding); TB capped at 2048 (v5e/v6e step-overhead
    amortization, tiny VMEM footprint with the 8-wide output)."""
    TB_CAP = 2048
    if B <= 256:
        n_tiles = 1
    else:
        n_tiles = max(2, pl.cdiv(B, TB_CAP))
        n_tiles += n_tiles % 2          # even tile count splits cleanly over 2 TCs
    TB = _round_up(pl.cdiv(B, n_tiles), 16)
    return TB, n_tiles, TB * n_tiles


def mlp_forward(x, params):
    """x: (B, input_dim) float32. params: (in, out) weights + (1, out) biases (f32)."""
    w1, b1, w2, b2, w3, b3 = (params[k] for k in ("w1", "b1", "w2", "b2", "w3", "b3"))
    B, in_dim = x.shape
    h1_dim = w1.shape[1]          # 256
    h2_dim = w2.shape[1]          # 128
    label_num = w3.shape[1]       # 2
    out_pad = _round_up(max(label_num, 8), 8)   # 8-column (sublane-aligned) output

    TB, n_tiles, B_pad = _choose_tiling(B)

    # x stays f32; the bf16 cast happens inside the kernel under the DMA pipeline.
    if B_pad != B:
        x = jnp.pad(x, ((0, B_pad - B), (0, 0)))

    w1_b = w1.astype(jnp.bfloat16)
    w2_b = w2.astype(jnp.bfloat16)
    # Pad fc3 to 8 output columns (zeros -> zero logits in the padded columns).
    w3_p = jnp.zeros((h2_dim, out_pad), jnp.bfloat16).at[:, :label_num].set(
        w3.astype(jnp.bfloat16))
    b3_p = jnp.zeros((1, out_pad), jnp.float32).at[:, :label_num].set(b3)

    const = lambda shape: pl.BlockSpec(shape, lambda i: (0, 0))   # VMEM-resident weights
    out = pl.pallas_call(
        mlp_kernel,
        out_shape=jax.ShapeDtypeStruct((B_pad, out_pad), jnp.float32),
        grid=(n_tiles,),
        in_specs=[
            pl.BlockSpec((TB, in_dim), lambda i: (i, 0)),   # x tile (f32)
            const((in_dim, h1_dim)), const((1, h1_dim)),    # w1, b1
            const((h1_dim, h2_dim)), const((1, h2_dim)),    # w2, b2
            const((h2_dim, out_pad)), const((1, out_pad)),  # w3 (8-col), b3 (8-col)
        ],
        out_specs=pl.BlockSpec((TB, out_pad), lambda i: (i, 0)),
        compiler_params=pltpu.CompilerParams(dimension_semantics=("parallel",)),
    )(x, w1_b, b1, w2_b, b2, w3_p, b3_p)
    return out[:B, :label_num]


def init_params(key, input_dim=26, label_num=2):
    """Deterministic init mimicking PyTorch Linear default (uniform +-1/sqrt(fan_in)).
    Weights stored transposed as (in, out); biases as (1, out)."""
    dims = [(input_dim, 256), (256, 128), (128, label_num)]
    params = {}
    for i, (fan_in, fan_out) in enumerate(dims, start=1):
        key, kw, kb = jax.random.split(key, 3)
        bound = 1.0 / (fan_in ** 0.5)
        params[f"w{i}"] = jax.random.uniform(
            kw, (fan_in, fan_out), jnp.float32, -bound, bound)
        params[f"b{i}"] = jax.random.uniform(
            kb, (1, fan_out), jnp.float32, -bound, bound)
    return params


def _ref_bf16(x, params):
    """Pure-JAX reference mirroring the kernel's bf16-inputs / f32-accumulate numerics."""
    xb = x.astype(jnp.bfloat16)
    w1b = params["w1"].astype(jnp.bfloat16)
    w2b = params["w2"].astype(jnp.bfloat16)
    w3b = params["w3"].astype(jnp.bfloat16)
    h1 = jnp.maximum(jnp.dot(xb, w1b, preferred_element_type=jnp.float32) + params["b1"], 0.0)
    h1 = h1.astype(jnp.bfloat16)
    h2 = jnp.maximum(jnp.dot(h1, w2b, preferred_element_type=jnp.float32) + params["b2"], 0.0)
    h2 = h2.astype(jnp.bfloat16)
    return jnp.dot(h2, w3b, preferred_element_type=jnp.float32) + params["b3"]


if __name__ == "__main__":
    key = jax.random.PRNGKey(0)
    kx, kx2, kp = jax.random.split(key, 3)
    input_dim, label_num = 26, 2
    params = init_params(kp, input_dim=input_dim, label_num=label_num)

    # Small batch (single tile).
    B = 8
    x = jax.random.normal(kx, (B, input_dim), jnp.float32)
    out = jax.block_until_ready(mlp_forward(x, params))
    assert out.shape == (B, label_num)
    assert jnp.allclose(out, _ref_bf16(x, params), atol=1e-3, rtol=1e-3)

    # Loose sanity check against the pure-f32 forward (bf16 intermediates are intentional).
    r = jnp.maximum(x @ params["w1"] + params["b1"], 0.0)
    r = jnp.maximum(r @ params["w2"] + params["b2"], 0.0)
    r = r @ params["w3"] + params["b3"]
    assert jnp.allclose(out, r, atol=5e-2, rtol=5e-2)

    # Larger batch exercising the multi-tile (parallel grid) + padding path.
    B2 = 300
    x2 = jax.random.normal(kx2, (B2, input_dim), jnp.float32)
    out2 = jax.block_until_ready(mlp_forward(x2, params))
    assert out2.shape == (B2, label_num)
    assert jnp.allclose(out2, _ref_bf16(x2, params), atol=1e-3, rtol=1e-3)

    print("KERNEL_OK")
</pallas_src>

<mosaic_0001>
module attributes {stable_mosaic.version = 11 : i64} {
  func.func @mlp_kernel(%arg0: i32, %arg1: memref<16x26xf32, #tpu.memory_space<vmem>>, %arg2: memref<26x256xbf16, #tpu.memory_space<vmem>>, %arg3: memref<1x256xf32, #tpu.memory_space<vmem>>, %arg4: memref<256x128xbf16, #tpu.memory_space<vmem>>, %arg5: memref<1x128xf32, #tpu.memory_space<vmem>>, %arg6: memref<128x8xbf16, #tpu.memory_space<vmem>>, %arg7: memref<1x8xf32, #tpu.memory_space<vmem>>, %arg8: memref<16x8xf32, #tpu.memory_space<vmem>>) attributes {dimension_semantics = [#tpu.dimension_semantics<parallel>], iteration_bounds = array<i64: 1>, scalar_prefetch = 0 : i64, scratch_operands = 0 : i64, tpu.core_type = #tpu.core_type<tc>, window_params = [{transform_indices = @transform_0, window_bounds = array<i64: 16, 26>}, {pipeline_mode = #tpu.pipeline_mode<synchronous>, transform_indices = @transform_1, window_bounds = array<i64: 26, 256>}, {pipeline_mode = #tpu.pipeline_mode<synchronous>, transform_indices = @transform_2, window_bounds = array<i64: 1, 256>}, {pipeline_mode = #tpu.pipeline_mode<synchronous>, transform_indices = @transform_3, window_bounds = array<i64: 256, 128>}, {pipeline_mode = #tpu.pipeline_mode<synchronous>, transform_indices = @transform_4, window_bounds = array<i64: 1, 128>}, {pipeline_mode = #tpu.pipeline_mode<synchronous>, transform_indices = @transform_5, window_bounds = array<i64: 128, 8>}, {pipeline_mode = #tpu.pipeline_mode<synchronous>, transform_indices = @transform_6, window_bounds = array<i64: 1, 8>}, {transform_indices = @transform_7, window_bounds = array<i64: 16, 8>}]} {
    %c0 = arith.constant 0 : index
    %c0_0 = arith.constant 0 : index
    %0 = vector.load %arg1[%c0, %c0_0] : memref<16x26xf32, #tpu.memory_space<vmem>>, vector<16x26xf32>
    %1 = arith.truncf %0 : vector<16x26xf32> to vector<16x26xbf16>
    %c0_1 = arith.constant 0 : index
    %c0_2 = arith.constant 0 : index
    %2 = vector.load %arg2[%c0_1, %c0_2] : memref<26x256xbf16, #tpu.memory_space<vmem>>, vector<26x256xbf16>
    %cst = arith.constant dense<0.000000e+00> : vector<16x256xf32>
    %3 = tpu.matmul %1, %2, %cst {dimension_numbers = #tpu.dot_dimension_numbers<[1], [0], [0], [1], [0, 0, 1, 1], [], []>} : vector<16x26xbf16>, vector<26x256xbf16>, vector<16x256xf32> -> vector<16x256xf32>
    %c0_3 = arith.constant 0 : index
    %c0_4 = arith.constant 0 : index
    %4 = vector.load %arg3[%c0_3, %c0_4] : memref<1x256xf32, #tpu.memory_space<vmem>>, vector<1x256xf32>
    %5 = vector.broadcast %4 : vector<1x256xf32> to vector<16x256xf32>
    %6 = arith.addf %3, %5 : vector<16x256xf32>
    %cst_5 = arith.constant 0.000000e+00 : f32
    %7 = vector.broadcast %cst_5 : f32 to vector<16x256xf32>
    %8 = arith.maximumf %6, %7 : vector<16x256xf32>
    %9 = arith.truncf %8 : vector<16x256xf32> to vector<16x256xbf16>
    %c0_6 = arith.constant 0 : index
    %c0_7 = arith.constant 0 : index
    %10 = vector.load %arg4[%c0_6, %c0_7] : memref<256x128xbf16, #tpu.memory_space<vmem>>, vector<256x128xbf16>
    %cst_8 = arith.constant dense<0.000000e+00> : vector<16x128xf32>
    %11 = tpu.matmul %9, %10, %cst_8 {dimension_numbers = #tpu.dot_dimension_numbers<[1], [0], [0], [1], [0, 0, 1, 1], [], []>} : vector<16x256xbf16>, vector<256x128xbf16>, vector<16x128xf32> -> vector<16x128xf32>
    %c0_9 = arith.constant 0 : index
    %c0_10 = arith.constant 0 : index
    %12 = vector.load %arg5[%c0_9, %c0_10] : memref<1x128xf32, #tpu.memory_space<vmem>>, vector<1x128xf32>
    %13 = vector.broadcast %12 : vector<1x128xf32> to vector<16x128xf32>
    %14 = arith.addf %11, %13 : vector<16x128xf32>
    %cst_11 = arith.constant 0.000000e+00 : f32
    %15 = vector.broadcast %cst_11 : f32 to vector<16x128xf32>
    %16 = arith.maximumf %14, %15 : vector<16x128xf32>
    %17 = arith.truncf %16 : vector<16x128xf32> to vector<16x128xbf16>
    %c0_12 = arith.constant 0 : index
    %c0_13 = arith.constant 0 : index
    %18 = vector.load %arg6[%c0_12, %c0_13] : memref<128x8xbf16, #tpu.memory_space<vmem>>, vector<128x8xbf16>
    %cst_14 = arith.constant dense<0.000000e+00> : vector<16x8xf32>
    %19 = tpu.matmul %17, %18, %cst_14 {dimension_numbers = #tpu.dot_dimension_numbers<[1], [0], [0], [1], [0, 0, 1, 1], [], []>} : vector<16x128xbf16>, vector<128x8xbf16>, vector<16x8xf32> -> vector<16x8xf32>
    %c0_15 = arith.constant 0 : index
    %c0_16 = arith.constant 0 : index
    %20 = vector.load %arg7[%c0_15, %c0_16] : memref<1x8xf32, #tpu.memory_space<vmem>>, vector<1x8xf32>
    %21 = vector.broadcast %20 : vector<1x8xf32> to vector<16x8xf32>
    %22 = arith.addf %19, %21 : vector<16x8xf32>
    %c0_17 = arith.constant 0 : index
    %c0_18 = arith.constant 0 : index
    %23 = vector.load %arg8[%c0_17, %c0_18] : memref<16x8xf32, #tpu.memory_space<vmem>>, vector<16x8xf32>
    tpu.vector_store %arg8[%c0_17, %c0_18], %22 {strides = array<i32>} : memref<16x8xf32, #tpu.memory_space<vmem>>, vector<16x8xf32>,
    return
  }
  func.func @transform_0(%arg0: i32) -> (i32, i32) {
    %c0_i32 = arith.constant 0 : i32
    %c0_i32_0 = arith.constant 0 : i32
    return %arg0, %c0_i32 : i32, i32
  }
  func.func @transform_1(%arg0: i32) -> (i32, i32) {
    %c0_i32 = arith.constant 0 : i32
    %c0_i32_0 = arith.constant 0 : i32
    %c0_i32_1 = arith.constant 0 : i32
    return %c0_i32, %c0_i32_0 : i32, i32
  }
  func.func @transform_2(%arg0: i32) -> (i32, i32) {
    %c0_i32 = arith.constant 0 : i32
    %c0_i32_0 = arith.constant 0 : i32
    %c0_i32_1 = arith.constant 0 : i32
    return %c0_i32, %c0_i32_0 : i32, i32
  }
  func.func @transform_3(%arg0: i32) -> (i32, i32) {
    %c0_i32 = arith.constant 0 : i32
    %c0_i32_0 = arith.constant 0 : i32
    %c0_i32_1 = arith.constant 0 : i32
    return %c0_i32, %c0_i32_0 : i32, i32
  }
  func.func @transform_4(%arg0: i32) -> (i32, i32) {
    %c0_i32 = arith.constant 0 : i32
    %c0_i32_0 = arith.constant 0 : i32
    %c0_i32_1 = arith.constant 0 : i32
    return %c0_i32, %c0_i32_0 : i32, i32
  }
  func.func @transform_5(%arg0: i32) -> (i32, i32) {
    %c0_i32 = arith.constant 0 : i32
    %c0_i32_0 = arith.constant 0 : i32
    %c0_i32_1 = arith.constant 0 : i32
    return %c0_i32, %c0_i32_0 : i32, i32
  }
  func.func @transform_6(%arg0: i32) -> (i32, i32) {
    %c0_i32 = arith.constant 0 : i32
    %c0_i32_0 = arith.constant 0 : i32
    %c0_i32_1 = arith.constant 0 : i32
    return %c0_i32, %c0_i32_0 : i32, i32
  }
  func.func @transform_7(%arg0: i32) -> (i32, i32) {
    %c0_i32 = arith.constant 0 : i32
    %c0_i32_0 = arith.constant 0 : i32
    return %arg0, %c0_i32 : i32, i32
  }
}

</mosaic_0001>

<llo_original>
// kernel: tpu_custom_call.1
$region0: #{tpu_custom_call.1}
  #allocation0 [shape = 'u32[]', space=smem, size = 0x4, offset = 0x4, fixed_abs, tag = 'smem constant byte address 0x4 - core index']
  #allocation1 [shape = 'u32[144,128]{1,0:T(1,128)}', space=vmem, size = 0x12000, scoped, tag = 'internal scratch']
  %s0 = inlined_call_operand.vmem [shape: f32[16,26], index: 0, kind: input, shape index: {}]
  %s1 = inlined_call_operand.vmem [shape: bf16[26,256], index: 1, kind: input, shape index: {}]
  %s2 = inlined_call_operand.vmem [shape: f32[1,256], index: 2, kind: input, shape index: {}]
  %s3 = inlined_call_operand.hbm [shape: bf16[256,128], index: 3, kind: input, shape index: {}]
  %s4 = inlined_call_operand.vmem [shape: f32[1,128], index: 4, kind: input, shape index: {}]
  %s5 = inlined_call_operand.vmem [shape: bf16[128,8], index: 5, kind: input, shape index: {}]
  %s6 = inlined_call_operand.vmem [shape: f32[1,8], index: 6, kind: input, shape index: {}]
  %s7 = inlined_call_operand.vmem [shape: f32[16,8], index: 7, kind: output, shape index: {}]
  %s8 = sld [smem:[#allocation0]]
  $region42: #{tpu_custom_call.1} parent=0
    _
  %s10 = ssub.s32 1, %s8
  %s11 = scalar_select 0, %s10, %s8
  $region1: #{tpu_custom_call.1} parent=0
    #allocation2 [shape = 'u8[65536]{0}', space=vmem, size = 0x10000, scoped, tag = 'input window, operand 3, single buffered']
    #allocation3 [shape = 's32[1]{0}', space=sflag, size = 0x4, scoped, tag = 'scoped memory for tpu_custom_call.1']
    %12 = vsyncpa [#allocation3], 0
    // Predicated region
    $region2: #{tpu_custom_call.1} parent=1 // pred_check
      _
    $region3: #{tpu_custom_call.1} parent=1 // pred_check_branch
      %14 = sbr.rel (0) target = $region5
    $region4: #{tpu_custom_call.1} parent=1 // pred_region
      _
    $region5: #{tpu_custom_call.1} parent=1 // pred_fallthru
      _
    // Predicated region
    $region6: #{tpu_custom_call.1} parent=1 // pred_check
      _
    $region7: #{tpu_custom_call.1} parent=1 // pred_check_branch
      %16 = sbr.rel (0) target = $region9
    $region8: #{tpu_custom_call.1} parent=1 // pred_region
      _
    $region9: #{tpu_custom_call.1} parent=1 // pred_fallthru
      _
    // Predicated region
    $region10: #{tpu_custom_call.1} parent=1 // pred_check
      _
    $region11: #{tpu_custom_call.1} parent=1 // pred_check_branch
      %18 = sbr.rel (0) target = $region13
    $region12: #{tpu_custom_call.1} parent=1 // pred_region
      _
    $region13: #{tpu_custom_call.1} parent=1 // pred_fallthru
      _
    // Predicated region
    $region14: #{tpu_custom_call.1} parent=1 // pred_check
      _
    $region15: #{tpu_custom_call.1} parent=1 // pred_check_branch
      %20 = sbr.rel (0) target = $region17
    $region16: #{tpu_custom_call.1} parent=1 // pred_region
      %s22 = ssub.s32 2048, 2048
      %23 = vsyncadd [#allocation3], %s22
      %s24 = sshll.u32 [#allocation2], 4
      %s25 = int_to_ptr.vmem [resolvable:$true] %s24
      %30 = dma.hbm_to_vmem [thread:$0]  %s3, 2048, %s25, [#allocation3], 64, 64, 4
    $region17: #{tpu_custom_call.1} parent=1 // pred_fallthru
      _
    // Predicated region
    $region18: #{tpu_custom_call.1} parent=1 // pred_check
      _
    $region19: #{tpu_custom_call.1} parent=1 // pred_check_branch
      %32 = sbr.rel (0) target = $region21
    $region20: #{tpu_custom_call.1} parent=1 // pred_region
      _
    $region21: #{tpu_custom_call.1} parent=1 // pred_fallthru
      _
    // Predicated region
    $region22: #{tpu_custom_call.1} parent=1 // pred_check
      _
    $region23: #{tpu_custom_call.1} parent=1 // pred_check_branch
      %34 = sbr.rel (0) target = $region25
    $region24: #{tpu_custom_call.1} parent=1 // pred_region
      _
    $region25: #{tpu_custom_call.1} parent=1 // pred_fallthru
      _
    // Predicated region
    $region26: #{tpu_custom_call.1} parent=1 // pred_check
      _
    $region27: #{tpu_custom_call.1} parent=1 // pred_check_branch
      %36 = sbr.rel (0) target = $region29
    $region28: #{tpu_custom_call.1} parent=1 // pred_region
      _
    $region29: #{tpu_custom_call.1} parent=1 // pred_fallthru
      _
    // Predicated region
    $region30: #{tpu_custom_call.1} parent=1 // pred_check
      _
    $region31: #{tpu_custom_call.1} parent=1 // pred_check_branch
      %38 = sbr.rel (0) target = $region33
    $region32: #{tpu_custom_call.1} parent=1 // pred_region
      %39 = dma.done [#allocation3], 2048
    $region33: #{tpu_custom_call.1} parent=1 // pred_fallthru
      _
    %v41 = vld [vmem:[%s0] sm:$0xff]
    %v42 = vld [vmem:[%s0 + $0x8] sm:$0xff]
    %v43 = vpack.c.bf16 %v42, %v41
    %v44 = vld [vmem:[%s1] sm:$0xff]
    %v45 = vld [vmem:[%s1 + $0x8] sm:$0xff]
    %v46 = vld [vmem:[%s1 + $0x10] sm:$0xff]
    %v47 = vld [vmem:[%s1 + $0x18] sm:$0x11]
    %v48 = vld [vmem:[%s2] sm:$0x3]
    %v50 = vlaneseq
    %v51 = vshrl.u32 %v50, 7
    %v52 = vsub.s32 0, %v51
    %v53 = vrot.slane %v48, %v52
    %v54 = vlaneseq
    %v55 = vshrl.u32 %v54, 7
    %v56 = vsub.s32 1, %v55
    %v57 = vrot.slane %v48, %v56
    %v64 = vunpack.c.l.b16 %v44
    %v65 = vunpack.c.h.b16 %v44
    %v66 = vunpack.c.l.b16 %v45
    %v67 = vunpack.c.h.b16 %v45
    %v68 = vunpack.c.l.b16 %v46
    %v69 = vunpack.c.h.b16 %v46
    %v70 = vunpack.c.l.b16 %v47
    %v71 = vunpack.c.h.b16 %v47
    %v72 = vpack.c.b16 %v66, %v64
    %v73 = vpack.c.b16 %v67, %v65
    %v74 = vpack.c.b16 %v70, %v68
    %v75 = vpack.c.b16 %v71, %v69
    %vm78 = vcmask 211968
    %v80 = vsel %vm78, %v43, 0
    %vm82 = vcmask 1044480
    %v84 = vsel %vm82, %v74, 0
    %v87 = vsel %vm82, %v75, 0
    %89 = vmatprep.subr.bf16.mxu0 %v73
    %90 = vmatpush1.bf16.msra.mxu0 %v72
    %91 = vmatprep.subr.bf16.mxu0 %v87
    %92 = vmatpush1.bf16.msra.mxu0 %v84
    %93 = vmatprep.subr.bf16.mxu0 0
    %94 = vmatpush1.bf16.msra.mxu0 0
    %95 = vmatprep.subr.bf16.mxu0 0
    %96 = vmatpush1.bf16.msra.mxu0 0
    %97 = vmatprep.subr.bf16.mxu0 0
    %98 = vmatpush1.bf16.msra.mxu0 0
    %99 = vmatprep.subr.bf16.mxu0 0
    %100 = vmatpush1.bf16.msra.mxu0 0
    %101 = vmatprep.subr.bf16.mxu0 0
    %102 = vmatpush1.bf16.msra.mxu0 0
    %103 = vmatprep.subr.bf16.mxu0 0
    %104 = vmatpush1.bf16.msra.mxu0 0
    %105 = vmatprep.subr.bf16.mxu0 0
    %106 = vmatpush1.bf16.msra.mxu0 0
    %107 = vmatprep.subr.bf16.mxu0 0
    %108 = vmatpush1.bf16.msra.mxu0 0
    %109 = vmatprep.subr.bf16.mxu0 0
    %110 = vmatpush1.bf16.msra.mxu0 0
    %111 = vmatprep.subr.bf16.mxu0 0
    %112 = vmatpush1.bf16.msra.mxu0 0
    %113 = vmatprep.subr.bf16.mxu0 0
    %114 = vmatpush1.bf16.msra.mxu0 0
    %115 = vmatprep.subr.bf16.mxu0 0
    %116 = vmatpush1.bf16.msra.mxu0 0
    %117 = vmatprep.subr.bf16.mxu0 0
    %118 = vmatpush1.bf16.msra.mxu0 0
    %119 = vmatprep.subr.bf16.mxu0 0
    %120 = vmatpush1.bf16.msra.mxu0 0
    %121 = vmatprep.mubr.bf16.mxu0 0
    %122 = vmatmul.mubr.bf16.gmra.mrb[0].mxu0 %v80
    %v123 = vpop.f32.mrb[0].mxu0
    %v124 = vadd.f32 %v53, %v123
    %v125 = vpop.f32.mrb[0].mxu0
    %v126 = vadd.f32 %v57, %v125
    %v127 = vpop.f32.mrb[0].mxu0
    %v128 = vadd.f32 %v53, %v127
    %v129 = vpop.f32.mrb[0].mxu0
    %v130 = vadd.f32 %v57, %v129
    %131 = vdwg.mxu0
    %v132 = vmax.f32 %v124, 0.0
    %v133 = vmax.f32 %v126, 0.0
    %v134 = vmax.f32 %v128, 0.0
    %v135 = vmax.f32 %v130, 0.0
    %v136 = vpack.c.bf16 %v134, %v132
    %v137 = vpack.c.bf16 %v135, %v133
    %v138 = vld [vmem:[#allocation2] sm:$0xf]
    %v139 = vld [vmem:[#allocation2 + $0x4] sm:$0xf]
    %v140 = vld [vmem:[#allocation2 + $0x8] sm:$0xf]
    %v141 = vld [vmem:[#allocation2 + $0xc] sm:$0xf]
    %v142 = vld [vmem:[#allocation2 + $0x10] sm:$0xf]
    %v143 = vld [vmem:[#allocation2 + $0x14] sm:$0xf]
    %v144 = vld [vmem:[#allocation2 + $0x18] sm:$0xf]
    %v145 = vld [vmem:[#allocation2 + $0x1c] sm:$0xf]
    %v146 = vld [vmem:[#allocation2 + $0x20] sm:$0xf]
    %v147 = vld [vmem:[#allocation2 + $0x24] sm:$0xf]
    %v148 = vld [vmem:[#allocation2 + $0x28] sm:$0xf]
    %v149 = vld [vmem:[#allocation2 + $0x2c] sm:$0xf]
    %v150 = vld [vmem:[#allocation2 + $0x30] sm:$0xf]
    %v151 = vld [vmem:[#allocation2 + $0x34] sm:$0xf]
    %v152 = vld [vmem:[#allocation2 + $0x38] sm:$0xf]
    %v153 = vld [vmem:[#allocation2 + $0x3c] sm:$0xf]
    %v154 = vld [vmem:[#allocation2 + $0x40] sm:$0xf]
    %v155 = vld [vmem:[#allocation2 + $0x44] sm:$0xf]
    %v156 = vld [vmem:[#allocation2 + $0x48] sm:$0xf]
    %v157 = vld [vmem:[#allocation2 + $0x4c] sm:$0xf]
    %v158 = vld [vmem:[#allocation2 + $0x50] sm:$0xf]
    %v159 = vld [vmem:[#allocation2 + $0x54] sm:$0xf]
    %v160 = vld [vmem:[#allocation2 + $0x58] sm:$0xf]
    %v161 = vld [vmem:[#allocation2 + $0x5c] sm:$0xf]
    %v162 = vld [vmem:[#allocation2 + $0x60] sm:$0xf]
    %v163 = vld [vmem:[#allocation2 + $0x64] sm:$0xf]
    %v164 = vld [vmem:[#allocation2 + $0x68] sm:$0xf]
    %v165 = vld [vmem:[#allocation2 + $0x6c] sm:$0xf]
    %v166 = vld [vmem:[#allocation2 + $0x70] sm:$0xf]
    %v167 = vld [vmem:[#allocation2 + $0x74] sm:$0xf]
    %v168 = vld [vmem:[#allocation2 + $0x78] sm:$0xf]
    %v169 = vld [vmem:[#allocation2 + $0x7c] sm:$0xf]
    %v170 = vld [vmem:[%s4] sm:$0x1]
    %v172 = vlaneseq
    %v173 = vshrl.u32 %v172, 7
    %v174 = vsub.s32 0, %v173
    %v175 = vrot.slane %v170, %v174
    %v209 = vunpack.c.l.b16 %v138
    %v210 = vunpack.c.l.b16 %v139
    %v211 = vunpack.c.l.b16 %v140
    %v212 = vunpack.c.l.b16 %v141
    %v213 = vunpack.c.l.b16 %v142
    %v214 = vunpack.c.l.b16 %v143
    %v215 = vunpack.c.l.b16 %v144
    %v216 = vunpack.c.l.b16 %v145
    %v217 = vunpack.c.l.b16 %v146
    %v218 = vunpack.c.l.b16 %v147
    %v219 = vunpack.c.l.b16 %v148
    %v220 = vunpack.c.l.b16 %v149
    %v221 = vunpack.c.l.b16 %v150
    %v222 = vunpack.c.l.b16 %v151
    %v223 = vunpack.c.l.b16 %v152
    %v224 = vunpack.c.l.b16 %v153
    %v225 = vunpack.c.l.b16 %v154
    %v226 = vunpack.c.l.b16 %v155
    %v227 = vunpack.c.l.b16 %v156
    %v228 = vunpack.c.l.b16 %v157
    %v229 = vunpack.c.l.b16 %v158
    %v230 = vunpack.c.l.b16 %v159
    %v231 = vunpack.c.l.b16 %v160
    %v232 = vunpack.c.l.b16 %v161
    %v233 = vunpack.c.l.b16 %v162
    %v234 = vunpack.c.l.b16 %v163
    %v235 = vunpack.c.l.b16 %v164
    %v236 = vunpack.c.l.b16 %v165
    %v237 = vunpack.c.l.b16 %v166
    %v238 = vunpack.c.l.b16 %v167
    %v239 = vunpack.c.l.b16 %v168
    %v240 = vunpack.c.l.b16 %v169
    %v241 = vpack.c.b16 %v210, %v209
    %v242 = vpack.c.b16 %v212, %v211
    %v243 = vpack.c.b16 %v214, %v213
    %v244 = vpack.c.b16 %v216, %v215
    %v245 = vpack.c.b16 %v218, %v217
    %v246 = vpack.c.b16 %v220, %v219
    %v247 = vpack.c.b16 %v222, %v221
    %v248 = vpack.c.b16 %v224, %v223
    %v249 = vpack.c.b16 %v226, %v225
    %v250 = vpack.c.b16 %v228, %v227
    %v251 = vpack.c.b16 %v230, %v229
    %v252 = vpack.c.b16 %v232, %v231
    %v253 = vpack.c.b16 %v234, %v233
    %v254 = vpack.c.b16 %v236, %v235
    %v255 = vpack.c.b16 %v238, %v237
    %v256 = vpack.c.b16 %v240, %v239
    %273 = vmatprep.subr.bf16.mxu0 0
    %274 = vmatpush1.bf16.msra.mxu0 %v241
    %275 = vmatprep.subr.bf16.mxu0 0
    %276 = vmatpush1.bf16.msra.mxu0 %v242
    %277 = vmatprep.subr.bf16.mxu0 0
    %278 = vmatpush1.bf16.msra.mxu0 %v243
    %279 = vmatprep.subr.bf16.mxu0 0
    %280 = vmatpush1.bf16.msra.mxu0 %v244
    %281 = vmatprep.subr.bf16.mxu0 0
    %282 = vmatpush1.bf16.msra.mxu0 %v245
    %283 = vmatprep.subr.bf16.mxu0 0
    %284 = vmatpush1.bf16.msra.mxu0 %v246
    %285 = vmatprep.subr.bf16.mxu0 0
    %286 = vmatpush1.bf16.msra.mxu0 %v247
    %287 = vmatprep.subr.bf16.mxu0 0
    %288 = vmatpush1.bf16.msra.mxu0 %v248
    %289 = vmatprep.subr.bf16.mxu0 0
    %290 = vmatpush1.bf16.msra.mxu0 %v249
    %291 = vmatprep.subr.bf16.mxu0 0
    %292 = vmatpush1.bf16.msra.mxu0 %v250
    %293 = vmatprep.subr.bf16.mxu0 0
    %294 = vmatpush1.bf16.msra.mxu0 %v251
    %295 = vmatprep.subr.bf16.mxu0 0
    %296 = vmatpush1.bf16.msra.mxu0 %v252
    %297 = vmatprep.subr.bf16.mxu0 0
    %298 = vmatpush1.bf16.msra.mxu0 %v253
    %299 = vmatprep.subr.bf16.mxu0 0
    %300 = vmatpush1.bf16.msra.mxu0 %v254
    %301 = vmatprep.subr.bf16.mxu0 0
    %302 = vmatpush1.bf16.msra.mxu0 %v255
    %303 = vmatprep.subr.bf16.mxu0 0
    %304 = vmatpush1.bf16.msra.mxu0 %v256
    %305 = vmatprep.mubr.bf16.mxu0 %v137
    %306 = vmatmul.mubr.bf16.gmra.mrb[0].mxu0 %v136
    %v307 = vpop.f32.mrb[0].mxu0
    %v308 = vadd.f32 %v175, %v307
    %v309 = vpop.f32.mrb[0].mxu0
    %v310 = vpop.f32.mrb[0].mxu0
    %v311 = vadd.f32 %v175, %v310
    %v312 = vpop.f32.mrb[0].mxu0
    %313 = vdwg.mxu0
    %v314 = vmax.f32 %v308, 0.0
    %v315 = vmax.f32 %v311, 0.0
    %v316 = vpack.c.bf16 %v315, %v314
    %v317 = vld [vmem:[%s5] sm:$0xf]
    %v318 = vld [vmem:[%s5 + $0x4] sm:$0xf]
    %v319 = vld [vmem:[%s5 + $0x8] sm:$0xf]
    %v320 = vld [vmem:[%s5 + $0xc] sm:$0xf]
    %v321 = vld [vmem:[%s5 + $0x10] sm:$0xf]
    %v322 = vld [vmem:[%s5 + $0x14] sm:$0xf]
    %v323 = vld [vmem:[%s5 + $0x18] sm:$0xf]
    %v324 = vld [vmem:[%s5 + $0x1c] sm:$0xf]
    %v325 = vld [vmem:[%s5 + $0x20] sm:$0xf]
    %v326 = vld [vmem:[%s5 + $0x24] sm:$0xf]
    %v327 = vld [vmem:[%s5 + $0x28] sm:$0xf]
    %v328 = vld [vmem:[%s5 + $0x2c] sm:$0xf]
    %v329 = vld [vmem:[%s5 + $0x30] sm:$0xf]
    %v330 = vld [vmem:[%s5 + $0x34] sm:$0xf]
    %v331 = vld [vmem:[%s5 + $0x38] sm:$0xf]
    %v332 = vld [vmem:[%s5 + $0x3c] sm:$0xf]
    %v333 = vld [vmem:[%s6] sm:$0x1]
    %v335 = vlaneseq
    %v336 = vshrl.u32 %v335, 7
    %v337 = vsub.s32 0, %v336
    %v338 = vrot.slane %v333, %v337
    %v356 = vunpack.c.l.b16 %v317
    %v357 = vunpack.c.l.b16 %v318
    %v358 = vunpack.c.l.b16 %v319
    %v359 = vunpack.c.l.b16 %v320
    %v360 = vunpack.c.l.b16 %v321
    %v361 = vunpack.c.l.b16 %v322
    %v362 = vunpack.c.l.b16 %v323
    %v363 = vunpack.c.l.b16 %v324
    %v364 = vunpack.c.l.b16 %v325
    %v365 = vunpack.c.l.b16 %v326
    %v366 = vunpack.c.l.b16 %v327
    %v367 = vunpack.c.l.b16 %v328
    %v368 = vunpack.c.l.b16 %v329
    %v369 = vunpack.c.l.b16 %v330
    %v370 = vunpack.c.l.b16 %v331
    %v371 = vunpack.c.l.b16 %v332
    %v372 = vpack.c.b16 %v357, %v356
    %v373 = vpack.c.b16 %v359, %v358
    %v374 = vpack.c.b16 %v361, %v360
    %v375 = vpack.c.b16 %v363, %v362
    %v376 = vpack.c.b16 %v365, %v364
    %v377 = vpack.c.b16 %v367, %v366
    %v378 = vpack.c.b16 %v369, %v368
    %v379 = vpack.c.b16 %v371, %v370
    %388 = vmatprep.subr.bf16.mxu0 0
    %389 = vmatpush1.bf16.msra.mxu0 %v372
    %390 = vmatprep.subr.bf16.mxu0 0
    %391 = vmatpush1.bf16.msra.mxu0 %v373
    %392 = vmatprep.subr.bf16.mxu0 0
    %393 = vmatpush1.bf16.msra.mxu0 %v374
    %394 = vmatprep.subr.bf16.mxu0 0
    %395 = vmatpush1.bf16.msra.mxu0 %v375
    %396 = vmatprep.subr.bf16.mxu0 0
    %397 = vmatpush1.bf16.msra.mxu0 %v376
    %398 = vmatprep.subr.bf16.mxu0 0
    %399 = vmatpush1.bf16.msra.mxu0 %v377
    %400 = vmatprep.subr.bf16.mxu0 0
    %401 = vmatpush1.bf16.msra.mxu0 %v378
    %402 = vmatprep.subr.bf16.mxu0 0
    %403 = vmatpush1.bf16.msra.mxu0 %v379
    %404 = vmatprep.subr.bf16.mxu0 0
    %405 = vmatpush1.bf16.msra.mxu0 0
    %406 = vmatprep.subr.bf16.mxu0 0
    %407 = vmatpush1.bf16.msra.mxu0 0
    %408 = vmatprep.subr.bf16.mxu0 0
    %409 = vmatpush1.bf16.msra.mxu0 0
    %410 = vmatprep.subr.bf16.mxu0 0
    %411 = vmatpush1.bf16.msra.mxu0 0
    %412 = vmatprep.subr.bf16.mxu0 0
    %413 = vmatpush1.bf16.msra.mxu0 0
    %414 = vmatprep.subr.bf16.mxu0 0
    %415 = vmatpush1.bf16.msra.mxu0 0
    %416 = vmatprep.subr.bf16.mxu0 0
    %417 = vmatpush1.bf16.msra.mxu0 0
    %418 = vmatprep.subr.bf16.mxu0 0
    %419 = vmatpush1.bf16.msra.mxu0 0
    %420 = vmatprep.mubr.bf16.mxu0 0
    %421 = vmatmul.mubr.bf16.gmra.mrb[0].mxu0 %v316
    %v422 = vpop.f32.mrb[0].mxu0
    %v423 = vadd.f32 %v338, %v422
    %v424 = vpop.f32.mrb[0].mxu0
    %v425 = vpop.f32.mrb[0].mxu0
    %v426 = vadd.f32 %v338, %v425
    %v427 = vpop.f32.mrb[0].mxu0
    %428 = vdwg.mxu0
    %vm429 = vcmask 64512
    %430 = vst.msk [vmem:[%s7] sm:$0xff] %vm429, %v423
    %431 = vst.msk [vmem:[%s7 + $0x8] sm:$0xff] %vm429, %v426
    // Predicated region
    $region34: #{tpu_custom_call.1} parent=1 // pred_check
      _
    $region35: #{tpu_custom_call.1} parent=1 // pred_check_branch
      %433 = sbr.rel (0) target = $region37
    $region36: #{tpu_custom_call.1} parent=1 // pred_region
      _
    $region37: #{tpu_custom_call.1} parent=1 // pred_fallthru
      _
    // Predicated region
    $region38: #{tpu_custom_call.1} parent=1 // pred_check
      _
    $region39: #{tpu_custom_call.1} parent=1 // pred_check_branch
      %435 = sbr.rel (0) target = $region41
    $region40: #{tpu_custom_call.1} parent=1 // pred_region
      _
    $region41: #{tpu_custom_call.1} parent=1 // pred_fallthru
      _
    %436 = vsyncpa [#allocation3], 1

</llo_original>
